<compile_context>
chip_gen: v7x
topology: tpu7x:2x2x1
jax: 0.10.0
libtpu: 0.0.40
codegen_flags: <defaults>
</compile_context>

<pallas_src>
import math
import jax
import jax.numpy as jnp
from jax.experimental import pallas as pl
from jax.experimental.pallas import tpu as pltpu


def _round_up(x, m):
    return (x + m - 1) // m * m


def _maybe_pad(a, target_shape):
    pads = tuple((0, t - s) for s, t in zip(a.shape, target_shape))
    if all(p == (0, 0) for p in pads):
        return a
    return jnp.pad(a, pads)


def _gated_mlp_kernel(x_ref, w_in_ref, b_in_ref, w_sc_ref, b_sc_ref,
                      w_out_ref, b_out_ref, o_ref, acc_ref):
    n = pl.program_id(1)

    @pl.when(n == 0)
    def _():
        acc_ref[...] = jnp.zeros_like(acc_ref)

    x = x_ref[...]  # native dtype (bf16 stays bf16) -> MXU, f32 accumulation

    # lin_in and lin_scale on this dim_inner tile (two MXU GEMMs, f32 results).
    h_in = jnp.dot(x, w_in_ref[...], preferred_element_type=jnp.float32)
    h_in = h_in + b_in_ref[...].astype(jnp.float32)
    h_sc = jnp.dot(x, w_sc_ref[...], preferred_element_type=jnp.float32)
    h_sc = h_sc + b_sc_ref[...].astype(jnp.float32)

    # Exact (erf-based) GELU in f32, matching torch.nn.GELU() default.
    gelu = 0.5 * h_in * (1.0 + jax.lax.erf(h_in * (1.0 / math.sqrt(2.0))))
    inner = (gelu * h_sc).astype(x_ref.dtype)  # downcast only for the MXU input

    # lin_out contraction over dim_inner, accumulated across the grid axis.
    acc_ref[...] += jnp.dot(inner, w_out_ref[...], preferred_element_type=jnp.float32)

    @pl.when(n == pl.num_programs(1) - 1)
    def _():
        out = acc_ref[...] + b_out_ref[...].astype(jnp.float32)
        o_ref[...] = out.astype(o_ref.dtype)


def dense_mlp_pallas(x, params, *, tm=256, tn=512):
    """x: (..., dim) -> (..., dim). All three matmuls + GELU fused in one kernel."""
    w_in, b_in, w_sc, b_sc, w_out, b_out = params
    dim = w_in.shape[0]
    dim_inner = w_in.shape[1]

    lead = x.shape[:-1]
    x2 = x.reshape(-1, dim)
    M = x2.shape[0]

    # ---- tile sizing (sublane-dense rows, lane-dense columns), padded shapes --
    row_mult = 16 if x.dtype == jnp.bfloat16 else 8
    tm = max(row_mult, min(_round_up(tm, row_mult), _round_up(M, row_mult)))
    M_p = _round_up(M, tm)
    D_p = _round_up(dim, 128)
    tn = max(128, min(_round_up(tn, 128), _round_up(dim_inner, 128)))
    N_p = _round_up(dim_inner, tn)
    NB = N_p // tn

    # Zero-pad activations & weights so every tile is dense; the padding
    # contributes exact zeros to the result and is sliced off at the end.
    x_p = _maybe_pad(x2, (M_p, D_p))
    w_in_p = _maybe_pad(w_in, (D_p, N_p))
    w_sc_p = _maybe_pad(w_sc, (D_p, N_p))
    b_in_p = _maybe_pad(b_in, (1, N_p))
    b_sc_p = _maybe_pad(b_sc, (1, N_p))
    w_out_p = _maybe_pad(w_out, (N_p, D_p))
    b_out_p = _maybe_pad(b_out, (1, D_p))

    # Advisory cost estimate: 2 input GEMMs + 1 output GEMM, erf per inner elem.
    flops = 2 * M_p * D_p * (2 * N_p) + 2 * M_p * N_p * D_p
    bytes_accessed = (
        x_p.size * x_p.dtype.itemsize
        + (w_in_p.size + w_sc_p.size + w_out_p.size) * w_in_p.dtype.itemsize
        + (b_in_p.size + b_sc_p.size + b_out_p.size) * b_in_p.dtype.itemsize
        + M_p * D_p * x.dtype.itemsize
    )
    cost = pl.CostEstimate(
        flops=flops, transcendentals=M_p * N_p, bytes_accessed=bytes_accessed
    )

    # VMEM budget hint: double-buffered tiles + f32 accumulator (capped so the
    # request stays valid on v7x's smaller physical VMEM).
    itemsize = x.dtype.itemsize
    need = (
        2 * (tm * D_p            # x tile
             + 2 * D_p * tn      # w_in + w_sc slabs
             + 2 * tn            # b_in + b_sc
             + tn * D_p          # w_out slab
             + D_p               # b_out
             + tm * D_p)         # output tile
        * itemsize
        + tm * D_p * 4           # f32 accumulator
    )
    vmem_limit = int(min(64 * 1024 * 1024, max(32 * 1024 * 1024, 2 * need)))

    out_p = pl.pallas_call(
        _gated_mlp_kernel,
        out_shape=jax.ShapeDtypeStruct((M_p, D_p), x.dtype),
        grid_spec=pltpu.PrefetchScalarGridSpec(
            num_scalar_prefetch=0,
            grid=(M_p // tm, NB),
            in_specs=[
                pl.BlockSpec((tm, D_p), lambda i, n: (i, 0)),     # x tile
                pl.BlockSpec((D_p, tn), lambda i, n: (0, n)),     # W_in slab
                pl.BlockSpec((1, tn), lambda i, n: (0, n)),       # b_in slab
                pl.BlockSpec((D_p, tn), lambda i, n: (0, n)),     # W_scale slab
                pl.BlockSpec((1, tn), lambda i, n: (0, n)),       # b_scale slab
                pl.BlockSpec((tn, D_p), lambda i, n: (n, 0)),     # W_out slab
                pl.BlockSpec((1, D_p), lambda i, n: (0, 0)),      # b_out
            ],
            out_specs=pl.BlockSpec((tm, D_p), lambda i, n: (i, 0)),
            scratch_shapes=[pltpu.VMEM((tm, D_p), jnp.float32)],
        ),
        compiler_params=pltpu.CompilerParams(
            dimension_semantics=("parallel", "arbitrary"),
            vmem_limit_bytes=vmem_limit,
        ),
        cost_estimate=cost,
    )(x_p, w_in_p, b_in_p, w_sc_p, b_sc_p, w_out_p, b_out_p)

    out = out_p[:M, :dim]
    return out.reshape(*lead, dim)


def init_params(key, dim, dim_inner, dtype=jnp.float32):
    """Deterministic init mimicking torch.nn.Linear (uniform +/- 1/sqrt(fan_in)).
    Weights stored transposed relative to PyTorch: (in_features, out_features)."""
    k = jax.random.split(key, 6)
    bnd_in = 1.0 / math.sqrt(dim)
    bnd_out = 1.0 / math.sqrt(dim_inner)
    w_in = jax.random.uniform(k[0], (dim, dim_inner), dtype, -bnd_in, bnd_in)
    b_in = jax.random.uniform(k[1], (1, dim_inner), dtype, -bnd_in, bnd_in)
    w_sc = jax.random.uniform(k[2], (dim, dim_inner), dtype, -bnd_in, bnd_in)
    b_sc = jax.random.uniform(k[3], (1, dim_inner), dtype, -bnd_in, bnd_in)
    w_out = jax.random.uniform(k[4], (dim_inner, dim), dtype, -bnd_out, bnd_out)
    b_out = jax.random.uniform(k[5], (1, dim), dtype, -bnd_out, bnd_out)
    return (w_in, b_in, w_sc, b_sc, w_out, b_out)


def dense_mlp_ref(x, params):
    """Pure-JAX reference (same math as the PyTorch module)."""
    w_in, b_in, w_sc, b_sc, w_out, b_out = params
    h = jax.nn.gelu(x @ w_in + b_in, approximate=False) * (x @ w_sc + b_sc)
    return h @ w_out + b_out


if __name__ == "__main__":
    key = jax.random.PRNGKey(0)

    # Test 1: lane-aligned dims.
    dim, dim_inner = 128, 256
    batch, seq = 2, 8
    kx, kp, key = jax.random.split(key, 3)
    x = jax.random.normal(kx, (batch, seq, dim), jnp.float32)
    params = init_params(kp, dim, dim_inner)
    out = jax.block_until_ready(dense_mlp_pallas(x, params))
    ref = dense_mlp_ref(x, params)
    assert out.shape == (batch, seq, dim)
    assert jnp.allclose(out, ref, atol=1e-4, rtol=1e-4), "mismatch vs reference (aligned)"

    # Test 2: unaligned dims / row count -> exercises the padding path.
    dim2, dim_inner2 = 96, 160
    kx2, kp2, key = jax.random.split(key, 3)
    x2 = jax.random.normal(kx2, (2, 5, dim2), jnp.float32)
    params2 = init_params(kp2, dim2, dim_inner2)
    out2 = jax.block_until_ready(dense_mlp_pallas(x2, params2))
    ref2 = dense_mlp_ref(x2, params2)
    assert out2.shape == (2, 5, dim2)
    assert jnp.allclose(out2, ref2, atol=1e-4, rtol=1e-4), "mismatch vs reference (padded)"

    print("KERNEL_OK")
</pallas_src>

<mosaic_0001>
module attributes {stable_mosaic.version = 11 : i64} {
  func.func @_gated_mlp_kernel(%arg0: i32, %arg1: i32, %arg2: memref<16x128xf32, #tpu.memory_space<vmem>>, %arg3: memref<128x256xf32, #tpu.memory_space<vmem>>, %arg4: memref<1x256xf32, #tpu.memory_space<vmem>>, %arg5: memref<128x256xf32, #tpu.memory_space<vmem>>, %arg6: memref<1x256xf32, #tpu.memory_space<vmem>>, %arg7: memref<256x128xf32, #tpu.memory_space<vmem>>, %arg8: memref<1x128xf32, #tpu.memory_space<vmem>>, %arg9: memref<16x128xf32, #tpu.memory_space<vmem>>, %arg10: memref<16x128xf32, #tpu.memory_space<vmem>>) attributes {dimension_semantics = [#tpu.dimension_semantics<parallel>, #tpu.dimension_semantics<arbitrary>], iteration_bounds = array<i64: 1, 1>, scalar_prefetch = 0 : i64, scratch_operands = 1 : i64, tpu.core_type = #tpu.core_type<tc>, window_params = [{transform_indices = @transform_0, window_bounds = array<i64: 16, 128>}, {transform_indices = @transform_1, window_bounds = array<i64: 128, 256>}, {transform_indices = @transform_2, window_bounds = array<i64: 1, 256>}, {transform_indices = @transform_3, window_bounds = array<i64: 128, 256>}, {transform_indices = @transform_4, window_bounds = array<i64: 1, 256>}, {transform_indices = @transform_5, window_bounds = array<i64: 256, 128>}, {pipeline_mode = #tpu.pipeline_mode<synchronous>, transform_indices = @transform_6, window_bounds = array<i64: 1, 128>}, {transform_indices = @transform_7, window_bounds = array<i64: 16, 128>}]} {
    %c0_i32 = arith.constant 0 : i32
    %0 = arith.cmpi eq, %arg1, %c0_i32 : i32
    %1 = arith.extui %0 : i1 to i32
    %c0_i32_0 = arith.constant 0 : i32
    %2 = arith.cmpi ne, %1, %c0_i32_0 : i32
    scf.if %2 {
      %cst_23 = arith.constant 0.000000e+00 : f32
      %31 = vector.broadcast %cst_23 : f32 to vector<16x128xf32>
      %c0_24 = arith.constant 0 : index
      %c0_25 = arith.constant 0 : index
      %32 = vector.load %arg10[%c0_24, %c0_25] : memref<16x128xf32, #tpu.memory_space<vmem>>, vector<16x128xf32>
      tpu.vector_store %arg10[%c0_24, %c0_25], %31 {strides = array<i32>} : memref<16x128xf32, #tpu.memory_space<vmem>>, vector<16x128xf32>,
    } else {
    }
    %c0 = arith.constant 0 : index
    %c0_1 = arith.constant 0 : index
    %3 = vector.load %arg2[%c0, %c0_1] : memref<16x128xf32, #tpu.memory_space<vmem>>, vector<16x128xf32>
    %c0_2 = arith.constant 0 : index
    %c0_3 = arith.constant 0 : index
    %4 = vector.load %arg3[%c0_2, %c0_3] : memref<128x256xf32, #tpu.memory_space<vmem>>, vector<128x256xf32>
    %cst = arith.constant dense<0.000000e+00> : vector<16x256xf32>
    %5 = tpu.matmul %3, %4, %cst {dimension_numbers = #tpu.dot_dimension_numbers<[1], [0], [0], [1], [0, 0, 1, 1], [], []>} : vector<16x128xf32>, vector<128x256xf32>, vector<16x256xf32> -> vector<16x256xf32>
    %c0_4 = arith.constant 0 : index
    %c0_5 = arith.constant 0 : index
    %6 = vector.load %arg4[%c0_4, %c0_5] : memref<1x256xf32, #tpu.memory_space<vmem>>, vector<1x256xf32>
    %7 = vector.broadcast %6 : vector<1x256xf32> to vector<16x256xf32>
    %8 = arith.addf %5, %7 : vector<16x256xf32>
    %c0_6 = arith.constant 0 : index
    %c0_7 = arith.constant 0 : index
    %9 = vector.load %arg5[%c0_6, %c0_7] : memref<128x256xf32, #tpu.memory_space<vmem>>, vector<128x256xf32>
    %cst_8 = arith.constant dense<0.000000e+00> : vector<16x256xf32>
    %10 = tpu.matmul %3, %9, %cst_8 {dimension_numbers = #tpu.dot_dimension_numbers<[1], [0], [0], [1], [0, 0, 1, 1], [], []>} : vector<16x128xf32>, vector<128x256xf32>, vector<16x256xf32> -> vector<16x256xf32>
    %c0_9 = arith.constant 0 : index
    %c0_10 = arith.constant 0 : index
    %11 = vector.load %arg6[%c0_9, %c0_10] : memref<1x256xf32, #tpu.memory_space<vmem>>, vector<1x256xf32>
    %12 = vector.broadcast %11 : vector<1x256xf32> to vector<16x256xf32>
    %13 = arith.addf %10, %12 : vector<16x256xf32>
    %cst_11 = arith.constant 5.000000e-01 : f32
    %14 = vector.broadcast %cst_11 : f32 to vector<16x256xf32>
    %15 = arith.mulf %14, %8 : vector<16x256xf32>
    %cst_12 = arith.constant 0.707106769 : f32
    %16 = vector.broadcast %cst_12 : f32 to vector<16x256xf32>
    %17 = arith.mulf %8, %16 : vector<16x256xf32>
    %18 = math.erf %17 : vector<16x256xf32>
    %cst_13 = arith.constant 1.000000e+00 : f32
    %19 = vector.broadcast %cst_13 : f32 to vector<16x256xf32>
    %20 = arith.addf %19, %18 : vector<16x256xf32>
    %21 = arith.mulf %15, %20 : vector<16x256xf32>
    %22 = arith.mulf %21, %13 : vector<16x256xf32>
    %c0_14 = arith.constant 0 : index
    %c0_15 = arith.constant 0 : index
    %23 = vector.load %arg10[%c0_14, %c0_15] : memref<16x128xf32, #tpu.memory_space<vmem>>, vector<16x128xf32>
    %c0_16 = arith.constant 0 : index
    %c0_17 = arith.constant 0 : index
    %24 = vector.load %arg7[%c0_16, %c0_17] : memref<256x128xf32, #tpu.memory_space<vmem>>, vector<256x128xf32>
    %cst_18 = arith.constant dense<0.000000e+00> : vector<16x128xf32>
    %25 = tpu.matmul %22, %24, %cst_18 {dimension_numbers = #tpu.dot_dimension_numbers<[1], [0], [0], [1], [0, 0, 1, 1], [], []>} : vector<16x256xf32>, vector<256x128xf32>, vector<16x128xf32> -> vector<16x128xf32>
    %26 = arith.addf %23, %25 : vector<16x128xf32>
    %c0_19 = arith.constant 0 : index
    %c0_20 = arith.constant 0 : index
    %27 = vector.load %arg10[%c0_19, %c0_20] : memref<16x128xf32, #tpu.memory_space<vmem>>, vector<16x128xf32>
    tpu.vector_store %arg10[%c0_19, %c0_20], %26 {strides = array<i32>} : memref<16x128xf32, #tpu.memory_space<vmem>>, vector<16x128xf32>,
    %c0_i32_21 = arith.constant 0 : i32
    %28 = arith.cmpi eq, %arg1, %c0_i32_21 : i32
    %29 = arith.extui %28 : i1 to i32
    %c0_i32_22 = arith.constant 0 : i32
    %30 = arith.cmpi ne, %29, %c0_i32_22 : i32
    scf.if %30 {
      %c0_23 = arith.constant 0 : index
      %c0_24 = arith.constant 0 : index
      %31 = vector.load %arg10[%c0_23, %c0_24] : memref<16x128xf32, #tpu.memory_space<vmem>>, vector<16x128xf32>
      %c0_25 = arith.constant 0 : index
      %c0_26 = arith.constant 0 : index
      %32 = vector.load %arg8[%c0_25, %c0_26] : memref<1x128xf32, #tpu.memory_space<vmem>>, vector<1x128xf32>
      %33 = vector.broadcast %32 : vector<1x128xf32> to vector<16x128xf32>
      %34 = arith.addf %31, %33 : vector<16x128xf32>
      %c0_27 = arith.constant 0 : index
      %c0_28 = arith.constant 0 : index
      %35 = vector.load %arg9[%c0_27, %c0_28] : memref<16x128xf32, #tpu.memory_space<vmem>>, vector<16x128xf32>
      tpu.vector_store %arg9[%c0_27, %c0_28], %34 {strides = array<i32>} : memref<16x128xf32, #tpu.memory_space<vmem>>, vector<16x128xf32>,
    } else {
    }
    return
  }
  func.func @transform_0(%arg0: i32, %arg1: i32) -> (i32, i32) {
    %c0_i32 = arith.constant 0 : i32
    %c0_i32_0 = arith.constant 0 : i32
    return %arg0, %c0_i32 : i32, i32
  }
  func.func @transform_1(%arg0: i32, %arg1: i32) -> (i32, i32) {
    %c0_i32 = arith.constant 0 : i32
    %c0_i32_0 = arith.constant 0 : i32
    return %c0_i32, %arg1 : i32, i32
  }
  func.func @transform_2(%arg0: i32, %arg1: i32) -> (i32, i32) {
    %c0_i32 = arith.constant 0 : i32
    %c0_i32_0 = arith.constant 0 : i32
    return %c0_i32, %arg1 : i32, i32
  }
  func.func @transform_3(%arg0: i32, %arg1: i32) -> (i32, i32) {
    %c0_i32 = arith.constant 0 : i32
    %c0_i32_0 = arith.constant 0 : i32
    return %c0_i32, %arg1 : i32, i32
  }
  func.func @transform_4(%arg0: i32, %arg1: i32) -> (i32, i32) {
    %c0_i32 = arith.constant 0 : i32
    %c0_i32_0 = arith.constant 0 : i32
    return %c0_i32, %arg1 : i32, i32
  }
  func.func @transform_5(%arg0: i32, %arg1: i32) -> (i32, i32) {
    %c0_i32 = arith.constant 0 : i32
    %c0_i32_0 = arith.constant 0 : i32
    return %arg1, %c0_i32 : i32, i32
  }
  func.func @transform_6(%arg0: i32, %arg1: i32) -> (i32, i32) {
    %c0_i32 = arith.constant 0 : i32
    %c0_i32_0 = arith.constant 0 : i32
    %c0_i32_1 = arith.constant 0 : i32
    return %c0_i32, %c0_i32_0 : i32, i32
  }
  func.func @transform_7(%arg0: i32, %arg1: i32) -> (i32, i32) {
    %c0_i32 = arith.constant 0 : i32
    %c0_i32_0 = arith.constant 0 : i32
    return %arg0, %c0_i32 : i32, i32
  }
}

</mosaic_0001>

<llo_original>
// kernel: tpu_custom_call.1
$region0: #{tpu_custom_call.1}
  #allocation0 [shape = 'u32[]', space=smem, size = 0x4, offset = 0x4, fixed_abs, tag = 'smem constant byte address 0x4 - core index']
  #allocation1 [shape = 'u32[144,128]{1,0:T(1,128)}', space=vmem, size = 0x12000, scoped, tag = 'internal scratch']
  #allocation2 [shape = 'f32[16,128]{1,0:T(8,128)}', space=vmem, size = 0x2000, scoped, tag = 'scratch operand']
  %s0 = inlined_call_operand.hbm [shape: f32[16,128], index: 0, kind: input, shape index: {}]
  %s1 = inlined_call_operand.hbm [shape: f32[128,256], index: 1, kind: input, shape index: {}]
  %s2 = inlined_call_operand.vmem [shape: f32[1,256], index: 2, kind: input, shape index: {}]
  %s3 = inlined_call_operand.hbm [shape: f32[128,256], index: 3, kind: input, shape index: {}]
  %s4 = inlined_call_operand.vmem [shape: f32[1,256], index: 4, kind: input, shape index: {}]
  %s5 = inlined_call_operand.hbm [shape: f32[256,128], index: 5, kind: input, shape index: {}]
  %s6 = inlined_call_operand.vmem [shape: f32[1,128], index: 6, kind: input, shape index: {}]
  %s7 = inlined_call_operand.hbm [shape: f32[16,128], index: 7, kind: output, shape index: {}]
  %s8 = sld [smem:[#allocation0]]
  $region62: #{tpu_custom_call.1} parent=0
    _
  %s10 = ssub.s32 1, %s8
  %s11 = scalar_select 0, %s10, %s8
  $region1: #{tpu_custom_call.1} parent=0
    #allocation3 [shape = 'u8[8192]{0}', space=vmem, size = 0x2000, scoped, tag = 'input window, operand 0, single buffered']
    #allocation4 [shape = 's32[1]{0}', space=sflag, size = 0x4, scoped, tag = 'scoped memory for tpu_custom_call.1']
    #allocation5 [shape = 's32[1]{0}', space=sflag, size = 0x4, scoped, tag = 'scoped memory for tpu_custom_call.1']
    #allocation6 [shape = 'u8[131072]{0}', space=vmem, size = 0x20000, scoped, tag = 'input window, operand 1, single buffered']
    #allocation7 [shape = 's32[1]{0}', space=sflag, size = 0x4, scoped, tag = 'scoped memory for tpu_custom_call.1']
    #allocation8 [shape = 'u8[131072]{0}', space=vmem, size = 0x20000, scoped, tag = 'input window, operand 3, single buffered']
    #allocation9 [shape = 'u8[131072]{0}', space=vmem, size = 0x20000, scoped, tag = 'input window, operand 5, single buffered']
    #allocation10 [shape = 's32[1]{0}', space=sflag, size = 0x4, scoped, tag = 'scoped memory for tpu_custom_call.1']
    #allocation11 [shape = 'u8[8192]{0}', space=vmem, size = 0x2000, scoped, tag = 'output window, operand 0, single buffered']
    %12 = vsyncpa [#allocation4], 0
    %13 = vsyncpa [#allocation7], 0
    %14 = vsyncpa [#allocation10], 0
    %15 = vsyncpa [#allocation5], 0
    // Predicated region
    $region2: #{tpu_custom_call.1} parent=1 // pred_check
      _
    $region3: #{tpu_custom_call.1} parent=1 // pred_check_branch
      %17 = sbr.rel (0) target = $region5
    $region4: #{tpu_custom_call.1} parent=1 // pred_region
      %s19 = ssub.s32 256, 256
      %20 = vsyncadd [#allocation4], %s19
      %s21 = sshll.u32 [#allocation3], 4
      %s22 = int_to_ptr.vmem [resolvable:$true] %s21
      %27 = dma.hbm_to_vmem [thread:$0]  %s0, 256, %s22, [#allocation4], 128, 128, 8
    $region5: #{tpu_custom_call.1} parent=1 // pred_fallthru
      _
    // Predicated region
    $region6: #{tpu_custom_call.1} parent=1 // pred_check
      _
    $region7: #{tpu_custom_call.1} parent=1 // pred_check_branch
      %29 = sbr.rel (0) target = $region9
    $region8: #{tpu_custom_call.1} parent=1 // pred_region
      %s31 = ssub.s32 4096, 4096
      %32 = vsyncadd [#allocation7], %s31
      %s33 = sshll.u32 [#allocation6], 4
      %s34 = int_to_ptr.vmem [resolvable:$true] %s33
      %39 = dma.hbm_to_vmem [thread:$0]  %s1, 4096, %s34, [#allocation7], 256, 256, 16
    $region9: #{tpu_custom_call.1} parent=1 // pred_fallthru
      _
    // Predicated region
    $region10: #{tpu_custom_call.1} parent=1 // pred_check
      _
    $region11: #{tpu_custom_call.1} parent=1 // pred_check_branch
      %41 = sbr.rel (0) target = $region13
    $region12: #{tpu_custom_call.1} parent=1 // pred_region
      _
    $region13: #{tpu_custom_call.1} parent=1 // pred_fallthru
      _
    // Predicated region
    $region14: #{tpu_custom_call.1} parent=1 // pred_check
      _
    $region15: #{tpu_custom_call.1} parent=1 // pred_check_branch
      %43 = sbr.rel (0) target = $region17
    $region16: #{tpu_custom_call.1} parent=1 // pred_region
      %s45 = ssub.s32 4096, 4096
      %46 = vsyncadd [#allocation7], %s45
      %s47 = sshll.u32 [#allocation8], 4
      %s48 = int_to_ptr.vmem [resolvable:$true] %s47
      %53 = dma.hbm_to_vmem [thread:$0]  %s3, 4096, %s48, [#allocation7], 256, 256, 16
    $region17: #{tpu_custom_call.1} parent=1 // pred_fallthru
      _
    // Predicated region
    $region18: #{tpu_custom_call.1} parent=1 // pred_check
      _
    $region19: #{tpu_custom_call.1} parent=1 // pred_check_branch
      %55 = sbr.rel (0) target = $region21
    $region20: #{tpu_custom_call.1} parent=1 // pred_region
      _
    $region21: #{tpu_custom_call.1} parent=1 // pred_fallthru
      _
    // Predicated region
    $region22: #{tpu_custom_call.1} parent=1 // pred_check
      _
    $region23: #{tpu_custom_call.1} parent=1 // pred_check_branch
      %57 = sbr.rel (0) target = $region25
    $region24: #{tpu_custom_call.1} parent=1 // pred_region
      %s59 = ssub.s32 4096, 4096
      %60 = vsyncadd [#allocation10], %s59
      %s61 = sshll.u32 [#allocation9], 4
      %s62 = int_to_ptr.vmem [resolvable:$true] %s61
      %67 = dma.hbm_to_vmem [thread:$0]  %s5, 4096, %s62, [#allocation10], 128, 128, 8
    $region25: #{tpu_custom_call.1} parent=1 // pred_fallthru
      _
    // Predicated region
    $region26: #{tpu_custom_call.1} parent=1 // pred_check
      _
    $region27: #{tpu_custom_call.1} parent=1 // pred_check_branch
      %69 = sbr.rel (0) target = $region29
    $region28: #{tpu_custom_call.1} parent=1 // pred_region
      _
    $region29: #{tpu_custom_call.1} parent=1 // pred_fallthru
      _
    // Predicated region
    $region30: #{tpu_custom_call.1} parent=1 // pred_check
      _
    $region31: #{tpu_custom_call.1} parent=1 // pred_check_branch
      %71 = sbr.rel (0) target = $region33
    $region32: #{tpu_custom_call.1} parent=1 // pred_region
      %72 = dma.done [#allocation4], 256
    $region33: #{tpu_custom_call.1} parent=1 // pred_fallthru
      _
    // Predicated region
    $region34: #{tpu_custom_call.1} parent=1 // pred_check
      _
    $region35: #{tpu_custom_call.1} parent=1 // pred_check_branch
      %74 = sbr.rel (0) target = $region37
    $region36: #{tpu_custom_call.1} parent=1 // pred_region
      %75 = dma.done [#allocation7], 4096
    $region37: #{tpu_custom_call.1} parent=1 // pred_fallthru
      _
    // Predicated region
    $region38: #{tpu_custom_call.1} parent=1 // pred_check
      _
    $region39: #{tpu_custom_call.1} parent=1 // pred_check_branch
      %77 = sbr.rel (0) target = $region41
    $region40: #{tpu_custom_call.1} parent=1 // pred_region
      %78 = dma.done [#allocation7], 4096
    $region41: #{tpu_custom_call.1} parent=1 // pred_fallthru
      _
    // Predicated region
    $region42: #{tpu_custom_call.1} parent=1 // pred_check
      _
    $region43: #{tpu_custom_call.1} parent=1 // pred_check_branch
      %80 = sbr.rel (0) target = $region45
    $region44: #{tpu_custom_call.1} parent=1 // pred_region
      %81 = dma.done [#allocation10], 4096
    $region45: #{tpu_custom_call.1} parent=1 // pred_fallthru
      _
    %p82 = scmp.eq.s32.totalorder 0, 0
    // Predicated region
    $region46: #{tpu_custom_call.1} parent=1 // pred_check
      %p83 = pneg %p82
    $region47: #{tpu_custom_call.1} parent=1 // pred_check_branch
      %85 = sbr.rel (%p83) target = $region49
    $region48: #{tpu_custom_call.1} parent=1 // pred_region
      %86 = vst [vmem:[#allocation2] sm:$0xff] 0.0
      %87 = vst [vmem:[#allocation2 + $0x8] sm:$0xff] 0.0
    $region49: #{tpu_custom_call.1} parent=1 // pred_fallthru
      _
    %v88 = vld [vmem:[#allocation3] sm:$0xff]
    %v89 = vld [vmem:[#allocation3 + $0x8] sm:$0xff]
    %v90 = vld [vmem:[#allocation6] sm:$0xff]
    %v91 = vld [vmem:[#allocation6 + $0x8] sm:$0xff]
    %v92 = vld [vmem:[#allocation6 + $0x10] sm:$0xff]
    %v93 = vld [vmem:[#allocation6 + $0x18] sm:$0xff]
    %v94 = vld [vmem:[#allocation6 + $0x20] sm:$0xff]
    %v95 = vld [vmem:[#allocation6 + $0x28] sm:$0xff]
    %v96 = vld [vmem:[#allocation6 + $0x30] sm:$0xff]
    %v97 = vld [vmem:[#allocation6 + $0x38] sm:$0xff]
    %v98 = vld [vmem:[#allocation6 + $0x40] sm:$0xff]
    %v99 = vld [vmem:[#allocation6 + $0x48] sm:$0xff]
    %v100 = vld [vmem:[#allocation6 + $0x50] sm:$0xff]
    %v101 = vld [vmem:[#allocation6 + $0x58] sm:$0xff]
    %v102 = vld [vmem:[#allocation6 + $0x60] sm:$0xff]
    %v103 = vld [vmem:[#allocation6 + $0x68] sm:$0xff]
    %v104 = vld [vmem:[#allocation6 + $0x70] sm:$0xff]
    %v105 = vld [vmem:[#allocation6 + $0x78] sm:$0xff]
    %v106 = vld [vmem:[#allocation6 + $0x80] sm:$0xff]
    %v107 = vld [vmem:[#allocation6 + $0x88] sm:$0xff]
    %v108 = vld [vmem:[#allocation6 + $0x90] sm:$0xff]
    %v109 = vld [vmem:[#allocation6 + $0x98] sm:$0xff]
    %v110 = vld [vmem:[#allocation6 + $0xa0] sm:$0xff]
    %v111 = vld [vmem:[#allocation6 + $0xa8] sm:$0xff]
    %v112 = vld [vmem:[#allocation6 + $0xb0] sm:$0xff]
    %v113 = vld [vmem:[#allocation6 + $0xb8] sm:$0xff]
    %v114 = vld [vmem:[#allocation6 + $0xc0] sm:$0xff]
    %v115 = vld [vmem:[#allocation6 + $0xc8] sm:$0xff]
    %v116 = vld [vmem:[#allocation6 + $0xd0] sm:$0xff]
    %v117 = vld [vmem:[#allocation6 + $0xd8] sm:$0xff]
    %v118 = vld [vmem:[#allocation6 + $0xe0] sm:$0xff]
    %v119 = vld [vmem:[#allocation6 + $0xe8] sm:$0xff]
    %v120 = vld [vmem:[#allocation6 + $0xf0] sm:$0xff]
    %v121 = vld [vmem:[#allocation6 + $0xf8] sm:$0xff]
    %v122 = vld [vmem:[%s2] sm:$0x3]
    %v124 = vlaneseq
    %v125 = vshrl.u32 %v124, 7
    %v126 = vsub.s32 0, %v125
    %v127 = vrot.slane %v122, %v126
    %v128 = vlaneseq
    %v129 = vshrl.u32 %v128, 7
    %v130 = vsub.s32 1, %v129
    %v131 = vrot.slane %v122, %v130
    %134 = vmatprep.subr.mxu0 %v91
    %135 = vmatpush1.msra.mxu0 %v90
    %136 = vmatprep.subr.mxu0 %v93
    %137 = vmatpush1.msra.mxu0 %v92
    %138 = vmatprep.subr.mxu0 %v95
    %139 = vmatpush1.msra.mxu0 %v94
    %140 = vmatprep.subr.mxu0 %v97
    %141 = vmatpush1.msra.mxu0 %v96
    %142 = vmatprep.subr.mxu0 %v99
    %143 = vmatpush1.msra.mxu0 %v98
    %144 = vmatprep.subr.mxu0 %v101
    %145 = vmatpush1.msra.mxu0 %v100
    %146 = vmatprep.subr.mxu0 %v103
    %147 = vmatpush1.msra.mxu0 %v102
    %148 = vmatprep.subr.mxu0 %v105
    %149 = vmatpush1.msra.mxu0 %v104
    %150 = vmatprep.subr.mxu0 %v107
    %151 = vmatpush1.msra.mxu0 %v106
    %152 = vmatprep.subr.mxu0 %v109
    %153 = vmatpush1.msra.mxu0 %v108
    %154 = vmatprep.subr.mxu0 %v111
    %155 = vmatpush1.msra.mxu0 %v110
    %156 = vmatprep.subr.mxu0 %v113
    %157 = vmatpush1.msra.mxu0 %v112
    %158 = vmatprep.subr.mxu0 %v115
    %159 = vmatpush1.msra.mxu0 %v114
    %160 = vmatprep.subr.mxu0 %v117
    %161 = vmatpush1.msra.mxu0 %v116
    %162 = vmatprep.subr.mxu0 %v119
    %163 = vmatpush1.msra.mxu0 %v118
    %164 = vmatprep.subr.mxu0 %v121
    %165 = vmatpush1.msra.mxu0 %v120
    %166 = vmatprep.subr.mxu0 0.0
    %167 = vmatpush1.msra.mxu0 0.0
    %168 = vmatprep.subr.mxu0 0.0
    %169 = vmatpush1.msra.mxu0 0.0
    %170 = vmatprep.subr.mxu0 0.0
    %171 = vmatpush1.msra.mxu0 0.0
    %172 = vmatprep.subr.mxu0 0.0
    %173 = vmatpush1.msra.mxu0 0.0
    %174 = vmatprep.subr.mxu0 0.0
    %175 = vmatpush1.msra.mxu0 0.0
    %176 = vmatprep.subr.mxu0 0.0
    %177 = vmatpush1.msra.mxu0 0.0
    %178 = vmatprep.subr.mxu0 0.0
    %179 = vmatpush1.msra.mxu0 0.0
    %180 = vmatprep.subr.mxu0 0.0
    %181 = vmatpush1.msra.mxu0 0.0
    %182 = vmatprep.subr.mxu0 0.0
    %183 = vmatpush1.msra.mxu0 0.0
    %184 = vmatprep.subr.mxu0 0.0
    %185 = vmatpush1.msra.mxu0 0.0
    %186 = vmatprep.subr.mxu0 0.0
    %187 = vmatpush1.msra.mxu0 0.0
    %188 = vmatprep.subr.mxu0 0.0
    %189 = vmatpush1.msra.mxu0 0.0
    %190 = vmatprep.subr.mxu0 0.0
    %191 = vmatpush1.msra.mxu0 0.0
    %192 = vmatprep.subr.mxu0 0.0
    %193 = vmatpush1.msra.mxu0 0.0
    %194 = vmatprep.subr.mxu0 0.0
    %195 = vmatpush1.msra.mxu0 0.0
    %196 = vmatprep.subr.mxu0 0.0
    %197 = vmatpush1.msra.mxu0 0.0
    %198 = vmatprep.mubr.f32.mxu0 0.0
    %199 = vmatmul.mubr.f32.gmra.mrb[0].mxu0 %v88
    %v200 = vpop.f32.mrb[0].mxu0
    %v201 = vadd.f32 %v127, %v200
    %v202 = vpop.f32.mrb[0].mxu0
    %v203 = vadd.f32 %v131, %v202
    %204 = vmatprep.mubr.f32.mxu0 0.0
    %205 = vmatmul.mubr.f32.gmra.mrb[0].mxu0 %v89
    %v206 = vpop.f32.mrb[0].mxu0
    %v207 = vadd.f32 %v127, %v206
    %v208 = vpop.f32.mrb[0].mxu0
    %v209 = vadd.f32 %v131, %v208
    %210 = vdwg.mxu0
    %v211 = vld [vmem:[#allocation8] sm:$0xff]
    %v212 = vld [vmem:[#allocation8 + $0x8] sm:$0xff]
    %v213 = vld [vmem:[#allocation8 + $0x10] sm:$0xff]
    %v214 = vld [vmem:[#allocation8 + $0x18] sm:$0xff]
    %v215 = vld [vmem:[#allocation8 + $0x20] sm:$0xff]
    %v216 = vld [vmem:[#allocation8 + $0x28] sm:$0xff]
    %v217 = vld [vmem:[#allocation8 + $0x30] sm:$0xff]
    %v218 = vld [vmem:[#allocation8 + $0x38] sm:$0xff]
    %v219 = vld [vmem:[#allocation8 + $0x40] sm:$0xff]
    %v220 = vld [vmem:[#allocation8 + $0x48] sm:$0xff]
    %v221 = vld [vmem:[#allocation8 + $0x50] sm:$0xff]
    %v222 = vld [vmem:[#allocation8 + $0x58] sm:$0xff]
    %v223 = vld [vmem:[#allocation8 + $0x60] sm:$0xff]
    %v224 = vld [vmem:[#allocation8 + $0x68] sm:$0xff]
    %v225 = vld [vmem:[#allocation8 + $0x70] sm:$0xff]
    %v226 = vld [vmem:[#allocation8 + $0x78] sm:$0xff]
    %v227 = vld [vmem:[#allocation8 + $0x80] sm:$0xff]
    %v228 = vld [vmem:[#allocation8 + $0x88] sm:$0xff]
    %v229 = vld [vmem:[#allocation8 + $0x90] sm:$0xff]
    %v230 = vld [vmem:[#allocation8 + $0x98] sm:$0xff]
    %v231 = vld [vmem:[#allocation8 + $0xa0] sm:$0xff]
    %v232 = vld [vmem:[#allocation8 + $0xa8] sm:$0xff]
    %v233 = vld [vmem:[#allocation8 + $0xb0] sm:$0xff]
    %v234 = vld [vmem:[#allocation8 + $0xb8] sm:$0xff]
    %v235 = vld [vmem:[#allocation8 + $0xc0] sm:$0xff]
    %v236 = vld [vmem:[#allocation8 + $0xc8] sm:$0xff]
    %v237 = vld [vmem:[#allocation8 + $0xd0] sm:$0xff]
    %v238 = vld [vmem:[#allocation8 + $0xd8] sm:$0xff]
    %v239 = vld [vmem:[#allocation8 + $0xe0] sm:$0xff]
    %v240 = vld [vmem:[#allocation8 + $0xe8] sm:$0xff]
    %v241 = vld [vmem:[#allocation8 + $0xf0] sm:$0xff]
    %v242 = vld [vmem:[#allocation8 + $0xf8] sm:$0xff]
    %v243 = vld [vmem:[%s4] sm:$0x3]
    %v245 = vlaneseq
    %v246 = vshrl.u32 %v245, 7
    %v247 = vsub.s32 0, %v246
    %v248 = vrot.slane %v243, %v247
    %v249 = vlaneseq
    %v250 = vshrl.u32 %v249, 7
    %v251 = vsub.s32 1, %v250
    %v252 = vrot.slane %v243, %v251
    %255 = vmatprep.subr.mxu0 %v212
    %256 = vmatpush1.msra.mxu0 %v211
    %257 = vmatprep.subr.mxu0 %v214
    %258 = vmatpush1.msra.mxu0 %v213
    %259 = vmatprep.subr.mxu0 %v216
    %260 = vmatpush1.msra.mxu0 %v215
    %261 = vmatprep.subr.mxu0 %v218
    %262 = vmatpush1.msra.mxu0 %v217
    %263 = vmatprep.subr.mxu0 %v220
    %264 = vmatpush1.msra.mxu0 %v219
    %265 = vmatprep.subr.mxu0 %v222
    %266 = vmatpush1.msra.mxu0 %v221
    %267 = vmatprep.subr.mxu0 %v224
    %268 = vmatpush1.msra.mxu0 %v223
    %269 = vmatprep.subr.mxu0 %v226
    %270 = vmatpush1.msra.mxu0 %v225
    %271 = vmatprep.subr.mxu0 %v228
    %272 = vmatpush1.msra.mxu0 %v227
    %273 = vmatprep.subr.mxu0 %v230
    %274 = vmatpush1.msra.mxu0 %v229
    %275 = vmatprep.subr.mxu0 %v232
    %276 = vmatpush1.msra.mxu0 %v231
    %277 = vmatprep.subr.mxu0 %v234
    %278 = vmatpush1.msra.mxu0 %v233
    %279 = vmatprep.subr.mxu0 %v236
    %280 = vmatpush1.msra.mxu0 %v235
    %281 = vmatprep.subr.mxu0 %v238
    %282 = vmatpush1.msra.mxu0 %v237
    %283 = vmatprep.subr.mxu0 %v240
    %284 = vmatpush1.msra.mxu0 %v239
    %285 = vmatprep.subr.mxu0 %v242
    %286 = vmatpush1.msra.mxu0 %v241
    %287 = vmatprep.subr.mxu0 0.0
    %288 = vmatpush1.msra.mxu0 0.0
    %289 = vmatprep.subr.mxu0 0.0
    %290 = vmatpush1.msra.mxu0 0.0
    %291 = vmatprep.subr.mxu0 0.0
    %292 = vmatpush1.msra.mxu0 0.0
    %293 = vmatprep.subr.mxu0 0.0
    %294 = vmatpush1.msra.mxu0 0.0
    %295 = vmatprep.subr.mxu0 0.0
    %296 = vmatpush1.msra.mxu0 0.0
    %297 = vmatprep.subr.mxu0 0.0
    %298 = vmatpush1.msra.mxu0 0.0
    %299 = vmatprep.subr.mxu0 0.0
    %300 = vmatpush1.msra.mxu0 0.0
    %301 = vmatprep.subr.mxu0 0.0
    %302 = vmatpush1.msra.mxu0 0.0
    %303 = vmatprep.subr.mxu0 0.0
    %304 = vmatpush1.msra.mxu0 0.0
    %305 = vmatprep.subr.mxu0 0.0
    %306 = vmatpush1.msra.mxu0 0.0
    %307 = vmatprep.subr.mxu0 0.0
    %308 = vmatpush1.msra.mxu0 0.0
    %309 = vmatprep.subr.mxu0 0.0
    %310 = vmatpush1.msra.mxu0 0.0
    %311 = vmatprep.subr.mxu0 0.0
    %312 = vmatpush1.msra.mxu0 0.0
    %313 = vmatprep.subr.mxu0 0.0
    %314 = vmatpush1.msra.mxu0 0.0
    %315 = vmatprep.subr.mxu0 0.0
    %316 = vmatpush1.msra.mxu0 0.0
    %317 = vmatprep.subr.mxu0 0.0
    %318 = vmatpush1.msra.mxu0 0.0
    %319 = vmatprep.mubr.f32.mxu0 0.0
    %320 = vmatmul.mubr.f32.gmra.mrb[0].mxu0 %v88
    %v321 = vpop.f32.mrb[0].mxu0
    %v322 = vadd.f32 %v248, %v321
    %v323 = vpop.f32.mrb[0].mxu0
    %v324 = vadd.f32 %v252, %v323
    %325 = vmatprep.mubr.f32.mxu0 0.0
    %326 = vmatmul.mubr.f32.gmra.mrb[0].mxu0 %v89
    %v327 = vpop.f32.mrb[0].mxu0
    %v328 = vadd.f32 %v248, %v327
    %v329 = vpop.f32.mrb[0].mxu0
    %v330 = vadd.f32 %v252, %v329
    %331 = vdwg.mxu0
    %v332 = vmul.f32 %v201, 0.5
    %v333 = vmul.f32 %v203, 0.5
    %v334 = vmul.f32 %v207, 0.5
    %v335 = vmul.f32 %v209, 0.5
    %v336 = vmul.f32 %v201, 0.70710677
    %v337 = vmul.f32 %v203, 0.70710677
    %v338 = vmul.f32 %v207, 0.70710677
    %v339 = vmul.f32 %v209, 0.70710677
    %v340 = verf.f32.pop %v336
    %v341 = verf.f32.pop %v337
    %v342 = verf.f32.pop %v338
    %v343 = verf.f32.pop %v339
    %v344 = vadd.f32 %v340, 1.0
    %v345 = vadd.f32 %v341, 1.0
    %v346 = vadd.f32 %v342, 1.0
    %v347 = vadd.f32 %v343, 1.0
    %v348 = vmul.f32 %v332, %v344
    %v349 = vmul.f32 %v333, %v345
    %v350 = vmul.f32 %v334, %v346
    %v351 = vmul.f32 %v335, %v347
    %v352 = vmul.f32 %v348, %v322
    %v353 = vmul.f32 %v349, %v324
    %v354 = vmul.f32 %v350, %v328
    %v355 = vmul.f32 %v351, %v330
    %v356 = vld [vmem:[#allocation2] sm:$0xff]
    %v357 = vld [vmem:[#allocation2 + $0x8] sm:$0xff]
    %v358 = vld [vmem:[#allocation9] sm:$0xff]
    %v359 = vld [vmem:[#allocation9 + $0x8] sm:$0xff]
    %v360 = vld [vmem:[#allocation9 + $0x10] sm:$0xff]
    %v361 = vld [vmem:[#allocation9 + $0x18] sm:$0xff]
    %v362 = vld [vmem:[#allocation9 + $0x20] sm:$0xff]
    %v363 = vld [vmem:[#allocation9 + $0x28] sm:$0xff]
    %v364 = vld [vmem:[#allocation9 + $0x30] sm:$0xff]
    %v365 = vld [vmem:[#allocation9 + $0x38] sm:$0xff]
    %v366 = vld [vmem:[#allocation9 + $0x40] sm:$0xff]
    %v367 = vld [vmem:[#allocation9 + $0x48] sm:$0xff]
    %v368 = vld [vmem:[#allocation9 + $0x50] sm:$0xff]
    %v369 = vld [vmem:[#allocation9 + $0x58] sm:$0xff]
    %v370 = vld [vmem:[#allocation9 + $0x60] sm:$0xff]
    %v371 = vld [vmem:[#allocation9 + $0x68] sm:$0xff]
    %v372 = vld [vmem:[#allocation9 + $0x70] sm:$0xff]
    %v373 = vld [vmem:[#allocation9 + $0x78] sm:$0xff]
    %v374 = vld [vmem:[#allocation9 + $0x80] sm:$0xff]
    %v375 = vld [vmem:[#allocation9 + $0x88] sm:$0xff]
    %v376 = vld [vmem:[#allocation9 + $0x90] sm:$0xff]
    %v377 = vld [vmem:[#allocation9 + $0x98] sm:$0xff]
    %v378 = vld [vmem:[#allocation9 + $0xa0] sm:$0xff]
    %v379 = vld [vmem:[#allocation9 + $0xa8] sm:$0xff]
    %v380 = vld [vmem:[#allocation9 + $0xb0] sm:$0xff]
    %v381 = vld [vmem:[#allocation9 + $0xb8] sm:$0xff]
    %v382 = vld [vmem:[#allocation9 + $0xc0] sm:$0xff]
    %v383 = vld [vmem:[#allocation9 + $0xc8] sm:$0xff]
    %v384 = vld [vmem:[#allocation9 + $0xd0] sm:$0xff]
    %v385 = vld [vmem:[#allocation9 + $0xd8] sm:$0xff]
    %v386 = vld [vmem:[#allocation9 + $0xe0] sm:$0xff]
    %v387 = vld [vmem:[#allocation9 + $0xe8] sm:$0xff]
    %v388 = vld [vmem:[#allocation9 + $0xf0] sm:$0xff]
    %v389 = vld [vmem:[#allocation9 + $0xf8] sm:$0xff]
    %390 = vmatprep.subr.mxu0 0.0
    %391 = vmatpush1.msra.mxu0 %v358
    %392 = vmatprep.subr.mxu0 0.0
    %393 = vmatpush1.msra.mxu0 %v359
    %394 = vmatprep.subr.mxu0 0.0
    %395 = vmatpush1.msra.mxu0 %v360
    %396 = vmatprep.subr.mxu0 0.0
    %397 = vmatpush1.msra.mxu0 %v361
    %398 = vmatprep.subr.mxu0 0.0
    %399 = vmatpush1.msra.mxu0 %v362
    %400 = vmatprep.subr.mxu0 0.0
    %401 = vmatpush1.msra.mxu0 %v363
    %402 = vmatprep.subr.mxu0 0.0
    %403 = vmatpush1.msra.mxu0 %v364
    %404 = vmatprep.subr.mxu0 0.0
    %405 = vmatpush1.msra.mxu0 %v365
    %406 = vmatprep.subr.mxu0 0.0
    %407 = vmatpush1.msra.mxu0 %v366
    %408 = vmatprep.subr.mxu0 0.0
    %409 = vmatpush1.msra.mxu0 %v367
    %410 = vmatprep.subr.mxu0 0.0
    %411 = vmatpush1.msra.mxu0 %v368
    %412 = vmatprep.subr.mxu0 0.0
    %413 = vmatpush1.msra.mxu0 %v369
    %414 = vmatprep.subr.mxu0 0.0
    %415 = vmatpush1.msra.mxu0 %v370
    %416 = vmatprep.subr.mxu0 0.0
    %417 = vmatpush1.msra.mxu0 %v371
    %418 = vmatprep.subr.mxu0 0.0
    %419 = vmatpush1.msra.mxu0 %v372
    %420 = vmatprep.subr.mxu0 0.0
    %421 = vmatpush1.msra.mxu0 %v373
    %422 = vmatprep.subr.mxu0 0.0
    %423 = vmatpush1.msra.mxu0 %v374
    %424 = vmatprep.subr.mxu0 0.0
    %425 = vmatpush1.msra.mxu0 %v375
    %426 = vmatprep.subr.mxu0 0.0
    %427 = vmatpush1.msra.mxu0 %v376
    %428 = vmatprep.subr.mxu0 0.0
    %429 = vmatpush1.msra.mxu0 %v377
    %430 = vmatprep.subr.mxu0 0.0
    %431 = vmatpush1.msra.mxu0 %v378
    %432 = vmatprep.subr.mxu0 0.0
    %433 = vmatpush1.msra.mxu0 %v379
    %434 = vmatprep.subr.mxu0 0.0
    %435 = vmatpush1.msra.mxu0 %v380
    %436 = vmatprep.subr.mxu0 0.0
    %437 = vmatpush1.msra.mxu0 %v381
    %438 = vmatprep.subr.mxu0 0.0
    %439 = vmatpush1.msra.mxu0 %v382
    %440 = vmatprep.subr.mxu0 0.0
    %441 = vmatpush1.msra.mxu0 %v383
    %442 = vmatprep.subr.mxu0 0.0
    %443 = vmatpush1.msra.mxu0 %v384
    %444 = vmatprep.subr.mxu0 0.0
    %445 = vmatpush1.msra.mxu0 %v385
    %446 = vmatprep.subr.mxu0 0.0
    %447 = vmatpush1.msra.mxu0 %v386
    %448 = vmatprep.subr.mxu0 0.0
    %449 = vmatpush1.msra.mxu0 %v387
    %450 = vmatprep.subr.mxu0 0.0
    %451 = vmatpush1.msra.mxu0 %v388
    %452 = vmatprep.subr.mxu0 0.0
    %453 = vmatpush1.msra.mxu0 %v389
    %454 = vmatprep.mubr.f32.mxu0 %v353
    %455 = vmatmul.mubr.f32.gmra.mrb[0].mxu0 %v352
    %v456 = vpop.f32.mrb[0].mxu0
    %v457 = vadd.f32 0.0, %v456
    %v458 = vpop.f32.mrb[0].mxu0
    %459 = vmatprep.mubr.f32.mxu0 %v355
    %460 = vmatmul.mubr.f32.gmra.mrb[0].mxu0 %v354
    %v461 = vpop.f32.mrb[0].mxu0
    %v462 = vadd.f32 0.0, %v461
    %v463 = vpop.f32.mrb[0].mxu0
    %464 = vdwg.mxu0
    %v465 = vadd.f32 %v356, %v457
    %v466 = vadd.f32 %v357, %v462
    %467 = vst [vmem:[#allocation2] sm:$0xff] %v465
    %468 = vst [vmem:[#allocation2 + $0x8] sm:$0xff] %v466
    // Predicated region
    $region50: #{tpu_custom_call.1} parent=1 // pred_check
      %p469 = pneg %p82
    $region51: #{tpu_custom_call.1} parent=1 // pred_check_branch
      %471 = sbr.rel (%p469) target = $region53
    $region52: #{tpu_custom_call.1} parent=1 // pred_region
      %v472 = vld [vmem:[#allocation2] sm:$0xff]
      %v473 = vld [vmem:[#allocation2 + $0x8] sm:$0xff]
      %v474 = vld [vmem:[%s6] sm:$0x1]
      %v476 = vlaneseq
      %v477 = vshrl.u32 %v476, 7
      %v478 = vsub.s32 0, %v477
      %v479 = vrot.slane %v474, %v478
      %v481 = vadd.f32 %v472, %v479
      %v482 = vadd.f32 %v473, %v479
      %483 = vst [vmem:[#allocation11] sm:$0xff] %v481
      %484 = vst [vmem:[#allocation11 + $0x8] sm:$0xff] %v482
    $region53: #{tpu_custom_call.1} parent=1 // pred_fallthru
      _
    // Predicated region
    $region54: #{tpu_custom_call.1} parent=1 // pred_check
      _
    $region55: #{tpu_custom_call.1} parent=1 // pred_check_branch
      %486 = sbr.rel (0) target = $region57
    $region56: #{tpu_custom_call.1} parent=1 // pred_region
      %s488 = ssub.s32 256, 256
      %489 = vsyncadd [#allocation5], %s488
      %s490 = sshll.u32 [#allocation11], 4
      %s491 = int_to_ptr.vmem [resolvable:$true] %s490
      %496 = dma.vmem_to_hbm [thread:$0]  %s491, 256, %s7, [#allocation5], 128, 128, 8
    $region57: #{tpu_custom_call.1} parent=1 // pred_fallthru
      _
    // Predicated region
    $region58: #{tpu_custom_call.1} parent=1 // pred_check
      _
    $region59: #{tpu_custom_call.1} parent=1 // pred_check_branch
      %498 = sbr.rel (0) target = $region61
    $region60: #{tpu_custom_call.1} parent=1 // pred_region
      %499 = dma.done [#allocation5], 256
    $region61: #{tpu_custom_call.1} parent=1 // pred_fallthru
      _
    %500 = vsyncpa [#allocation4], 1
    %501 = vsyncpa [#allocation7], 1
    %502 = vsyncpa [#allocation10], 1
    %503 = vsyncpa [#allocation5], 1

</llo_original>
